<compile_context>
chip_gen: v7x
topology: tpu7x:2x2x1
jax: 0.10.0
libtpu: 0.0.40
codegen_flags: <defaults>
</compile_context>

<pallas_src>
import functools

import jax
import jax.numpy as jnp
from jax import lax
from jax.experimental import pallas as pl
from jax.experimental.pallas import tpu as pltpu


def task_decomp_kernel(feat_ref, w1_ref, b1_ref, w2e_ref, b2r_ref, redw_ref,
                       out_ref, *, batch_block, inv_hw):
    # Shared (per grid step) weight loads, hoisted out of the batch loop.
    w1 = w1_ref[...]          # (hidden, C)   f32
    b1 = b1_ref[...]          # (hidden, 1)   f32
    w2e = w2e_ref[...]        # (hidden, C)   f32  (W2 expanded to C output channels)
    b2r = b2r_ref[...]        # (1, C)        f32
    redw = redw_ref[...]      # (fc, C)       feat dtype (f32 or bf16)

    for i in range(batch_block):                      # small static unroll
        x = feat_ref[i]                               # (C, HWp)

        # Spatial mean: padded lanes are zero, divide by the true H*W (XLU reduce).
        avg = jnp.sum(x.astype(jnp.float32), axis=1, keepdims=True) * inv_hw  # (C, 1)

        # Layer-attention MLP (f32 throughout).
        z = jnp.dot(w1, avg, preferred_element_type=jnp.float32) + b1         # (hidden, 1)
        z = jnp.maximum(z, 0.0)
        # (hidden,1)^T @ (hidden,C) -> lane-dense (1, C) logits row.
        logits = lax.dot_general(z, w2e, (((0,), (0,)), ((), ())),
                                 preferred_element_type=jnp.float32) + b2r    # (1, C)
        attn_row = jax.nn.sigmoid(logits)                                     # (1, C)

        # Weight-side scaling: only fc*C elements touched.
        w_scaled = (redw * attn_row).astype(x.dtype)                          # (fc, C)

        # Dynamic 1x1 conv as a (fc,C)@(C,HWp) MXU matmul, f32 accumulation.
        y = jnp.dot(w_scaled, x, preferred_element_type=jnp.float32)          # (fc, HWp)

        # ConvModule default activation: ReLU.
        out_ref[i] = jnp.maximum(y, 0.0).astype(out_ref.dtype)


def task_decomposition(feat, w1, b1, w2, b2, red_w, feat_channels, stacked_convs,
                       *, batch_block=1, compute_dtype=jnp.float32):
    """feat: (B, C, H, W) float32, C = feat_channels * stacked_convs.

    w1: (hidden, C), b1: (hidden,), w2: (S, hidden), b2: (S,), red_w: (fc, C).
    """
    b, c, h, w = feat.shape
    fc, s = feat_channels, stacked_convs
    hidden = w1.shape[0]
    assert c == fc * s
    assert c % 8 == 0 and fc % 8 == 0

    # Clamp batch_block to the largest divisor of B that is <= requested.
    bb = max(1, min(batch_block, b))
    while b % bb != 0:
        bb -= 1

    hw = h * w
    hwp = ((hw + 127) // 128) * 128          # lane-dense (128-aligned) spatial axis

    feat2 = feat.reshape(b, c, hw)
    if hwp != hw:
        feat2 = jnp.pad(feat2, ((0, 0), (0, 0), (0, hwp - hw)))   # zero tail
    feat2 = feat2.astype(compute_dtype)
    redw = red_w.astype(compute_dtype)

    # Attention MLP params (kept f32). W2/b2 expanded so the MLP directly emits a
    # per-input-channel attention row: column c uses group c // feat_channels.
    w1f = w1.astype(jnp.float32)                                   # (hidden, C)
    b1c = b1.reshape(hidden, 1).astype(jnp.float32)                # (hidden, 1)
    w2e = jnp.repeat(w2, fc, axis=0).T.astype(jnp.float32)         # (hidden, C)
    b2r = jnp.repeat(b2, fc).reshape(1, c).astype(jnp.float32)     # (1, C)

    grid = (b // bb,)

    feat_bytes = jnp.dtype(compute_dtype).itemsize
    # double-buffered feat + out blocks, plus (small) resident weights
    vmem_need = 2 * (bb * c * hwp * feat_bytes + bb * fc * hwp * 4) \
        + (2 * hidden * c + hidden + c + fc * c) * 4
    vmem_limit = int(min(max(2 * vmem_need, 32 * 1024 * 1024), 64 * 1024 * 1024))
    # TODO(synk): for very large FPN levels on v7x (64 MiB VMEM) add an HW-tile grid
    # axis with a two-pass (reduce-then-apply) mean instead of full-HW blocks.

    cost = pl.CostEstimate(
        flops=2 * b * fc * c * hwp + 4 * b * hidden * c,
        transcendentals=b * c,
        bytes_accessed=b * (c * hwp * feat_bytes + fc * hwp * 4)
        + (2 * hidden * c + fc * c) * 4,
    )

    kernel = functools.partial(task_decomp_kernel, batch_block=bb, inv_hw=1.0 / hw)

    out = pl.pallas_call(
        kernel,
        out_shape=jax.ShapeDtypeStruct((b, fc, hwp), jnp.float32),
        grid_spec=pltpu.PrefetchScalarGridSpec(
            num_scalar_prefetch=0,
            grid=grid,
            in_specs=[
                pl.BlockSpec((bb, c, hwp), lambda i: (i, 0, 0)),   # feat (bb batches)
                pl.BlockSpec((hidden, c), lambda i: (0, 0)),       # W1
                pl.BlockSpec((hidden, 1), lambda i: (0, 0)),       # b1
                pl.BlockSpec((hidden, c), lambda i: (0, 0)),       # W2 expanded (T)
                pl.BlockSpec((1, c), lambda i: (0, 0)),            # b2 expanded row
                pl.BlockSpec((fc, c), lambda i: (0, 0)),           # reduction conv W
            ],
            out_specs=pl.BlockSpec((bb, fc, hwp), lambda i: (i, 0, 0)),
        ),
        compiler_params=pltpu.CompilerParams(
            dimension_semantics=("parallel",),
            vmem_limit_bytes=vmem_limit),
        cost_estimate=cost,
    )(feat2, w1f, b1c, w2e, b2r, redw)

    return out[:, :, :hw].reshape(b, fc, h, w)


def reference(feat, w1, b1, w2, b2, red_w, feat_channels, stacked_convs):
    """Pure-JAX f32 reference mirroring the PyTorch forward pass."""
    b, c, h, w = feat.shape
    fc, s = feat_channels, stacked_convs
    avg = feat.mean(axis=(2, 3))                                   # (b, c)
    z = jax.nn.relu(avg @ w1.T + b1)                               # (b, hidden)
    attn = jax.nn.sigmoid(z @ w2.T + b2)                           # (b, s)
    conv_w = attn[:, None, :, None] * red_w.reshape(1, fc, s, fc)  # (b, fc, s, fc)
    conv_w = conv_w.reshape(b, fc, c)
    out = jnp.einsum("bfc,bcp->bfp", conv_w, feat.reshape(b, c, h * w))
    return jax.nn.relu(out).reshape(b, fc, h, w)


if __name__ == "__main__":
    feat_channels = 32
    stacked_convs = 4
    la_down_rate = 8
    in_channels = feat_channels * stacked_convs      # 128
    hidden = in_channels // la_down_rate             # 16

    key = jax.random.PRNGKey(0)
    k_feat, k_w1, k_w2, k_red, k_feat2 = jax.random.split(key, 5)

    # layer_attention conv weights: normal_init(std=0.001), bias=0
    w1 = 0.001 * jax.random.normal(k_w1, (hidden, in_channels), dtype=jnp.float32)
    b1 = jnp.zeros((hidden,), dtype=jnp.float32)
    w2 = 0.001 * jax.random.normal(k_w2, (stacked_convs, hidden), dtype=jnp.float32)
    b2 = jnp.zeros((stacked_convs,), dtype=jnp.float32)
    # reduction_conv 1x1 weight: normal_init(std=0.01); its bias is unused in forward.
    red_w = 0.01 * jax.random.normal(k_red, (feat_channels, in_channels),
                                     dtype=jnp.float32)

    # --- Case 1: f32, lane-aligned spatial map, 2 batch elements per grid step.
    B, H, W = 4, 16, 16
    feat = jax.random.normal(k_feat, (B, in_channels, H, W), dtype=jnp.float32)
    out = task_decomposition(feat, w1, b1, w2, b2, red_w,
                             feat_channels, stacked_convs,
                             batch_block=2, compute_dtype=jnp.float32)
    out = jax.block_until_ready(out)
    ref = reference(feat, w1, b1, w2, b2, red_w, feat_channels, stacked_convs)
    assert out.shape == (B, feat_channels, H, W)
    assert jnp.allclose(out, ref, rtol=1e-4, atol=1e-5), "f32 mismatch vs reference"

    # --- Case 2: bf16 streaming + non-128-aligned spatial size (exercises lane padding).
    B2, H2, W2 = 2, 13, 13
    feat_b = jax.random.normal(k_feat2, (B2, in_channels, H2, W2), dtype=jnp.float32)
    out_b = task_decomposition(feat_b, w1, b1, w2, b2, red_w,
                               feat_channels, stacked_convs,
                               batch_block=1, compute_dtype=jnp.bfloat16)
    out_b = jax.block_until_ready(out_b)
    ref_b = reference(feat_b, w1, b1, w2, b2, red_w, feat_channels, stacked_convs)
    assert out_b.shape == (B2, feat_channels, H2, W2)
    assert jnp.allclose(out_b, ref_b, rtol=5e-2, atol=5e-3), "bf16 mismatch vs reference"

    print("KERNEL_OK")
</pallas_src>

<mosaic_0001>
module attributes {stable_mosaic.version = 11 : i64} {
  func.func @task_decomp_kernel(%arg0: i32, %arg1: memref<2x128x256xf32, #tpu.memory_space<vmem>>, %arg2: memref<16x128xf32, #tpu.memory_space<vmem>>, %arg3: memref<16x1xf32, #tpu.memory_space<vmem>>, %arg4: memref<16x128xf32, #tpu.memory_space<vmem>>, %arg5: memref<1x128xf32, #tpu.memory_space<vmem>>, %arg6: memref<32x128xf32, #tpu.memory_space<vmem>>, %arg7: memref<2x32x256xf32, #tpu.memory_space<vmem>>) attributes {dimension_semantics = [#tpu.dimension_semantics<parallel>], iteration_bounds = array<i64: 2>, scalar_prefetch = 0 : i64, scratch_operands = 0 : i64, tpu.core_type = #tpu.core_type<tc>, window_params = [{transform_indices = @transform_0, window_bounds = array<i64: 2, 128, 256>}, {pipeline_mode = #tpu.pipeline_mode<synchronous>, transform_indices = @transform_1, window_bounds = array<i64: 16, 128>}, {pipeline_mode = #tpu.pipeline_mode<synchronous>, transform_indices = @transform_2, window_bounds = array<i64: 16, 1>}, {pipeline_mode = #tpu.pipeline_mode<synchronous>, transform_indices = @transform_3, window_bounds = array<i64: 16, 128>}, {pipeline_mode = #tpu.pipeline_mode<synchronous>, transform_indices = @transform_4, window_bounds = array<i64: 1, 128>}, {pipeline_mode = #tpu.pipeline_mode<synchronous>, transform_indices = @transform_5, window_bounds = array<i64: 32, 128>}, {transform_indices = @transform_6, window_bounds = array<i64: 2, 32, 256>}]} {
    %c0 = arith.constant 0 : index
    %c0_0 = arith.constant 0 : index
    %0 = vector.load %arg2[%c0, %c0_0] : memref<16x128xf32, #tpu.memory_space<vmem>>, vector<16x128xf32>
    %c0_1 = arith.constant 0 : index
    %c0_2 = arith.constant 0 : index
    %1 = vector.load %arg3[%c0_1, %c0_2] : memref<16x1xf32, #tpu.memory_space<vmem>>, vector<16x1xf32>
    %c0_3 = arith.constant 0 : index
    %c0_4 = arith.constant 0 : index
    %2 = vector.load %arg4[%c0_3, %c0_4] : memref<16x128xf32, #tpu.memory_space<vmem>>, vector<16x128xf32>
    %c0_5 = arith.constant 0 : index
    %c0_6 = arith.constant 0 : index
    %3 = vector.load %arg5[%c0_5, %c0_6] : memref<1x128xf32, #tpu.memory_space<vmem>>, vector<1x128xf32>
    %c0_7 = arith.constant 0 : index
    %c0_8 = arith.constant 0 : index
    %4 = vector.load %arg6[%c0_7, %c0_8] : memref<32x128xf32, #tpu.memory_space<vmem>>, vector<32x128xf32>
    %c0_9 = arith.constant 0 : index
    %c0_10 = arith.constant 0 : index
    %c0_11 = arith.constant 0 : index
    %5 = vector.load %arg1[%c0_9, %c0_10, %c0_11] : memref<2x128x256xf32, #tpu.memory_space<vmem>>, vector<1x128x256xf32>
    %6 = vector.shape_cast %5 : vector<1x128x256xf32> to vector<128x256xf32>
    %cst = arith.constant dense<0.000000e+00> : vector<128xf32>
    %7 = vector.multi_reduction <add>, %6, %cst [1] : vector<128x256xf32> to vector<128xf32>
    %8 = vector.shape_cast %7 : vector<128xf32> to vector<128x1xf32>
    %cst_12 = arith.constant 3.906250e-03 : f32
    %9 = vector.broadcast %cst_12 : f32 to vector<128x1xf32>
    %10 = arith.mulf %8, %9 : vector<128x1xf32>
    %cst_13 = arith.constant dense<0.000000e+00> : vector<16x1xf32>
    %11 = tpu.matmul %0, %10, %cst_13 {dimension_numbers = #tpu.dot_dimension_numbers<[1], [0], [0], [1], [0, 0, 1, 1], [], []>} : vector<16x128xf32>, vector<128x1xf32>, vector<16x1xf32> -> vector<16x1xf32>
    %12 = arith.addf %11, %1 : vector<16x1xf32>
    %cst_14 = arith.constant 0.000000e+00 : f32
    %13 = vector.broadcast %cst_14 : f32 to vector<16x1xf32>
    %14 = arith.maximumf %12, %13 : vector<16x1xf32>
    %cst_15 = arith.constant dense<0.000000e+00> : vector<1x128xf32>
    %15 = tpu.matmul %14, %2, %cst_15 {dimension_numbers = #tpu.dot_dimension_numbers<[0], [0], [1], [1], [0, 1, 1, 1], [], []>} : vector<16x1xf32>, vector<16x128xf32>, vector<1x128xf32> -> vector<1x128xf32>
    %16 = arith.addf %15, %3 : vector<1x128xf32>
    %17 = arith.negf %16 : vector<1x128xf32>
    %18 = math.exp %17 : vector<1x128xf32>
    %cst_16 = arith.constant 1.000000e+00 : f32
    %19 = vector.broadcast %cst_16 : f32 to vector<1x128xf32>
    %20 = arith.addf %19, %18 : vector<1x128xf32>
    %21 = arith.divf %19, %20 : vector<1x128xf32>
    %22 = vector.broadcast %21 : vector<1x128xf32> to vector<32x128xf32>
    %23 = arith.mulf %4, %22 : vector<32x128xf32>
    %cst_17 = arith.constant dense<0.000000e+00> : vector<32x256xf32>
    %24 = tpu.matmul %23, %6, %cst_17 {dimension_numbers = #tpu.dot_dimension_numbers<[1], [0], [0], [1], [0, 0, 1, 1], [], []>} : vector<32x128xf32>, vector<128x256xf32>, vector<32x256xf32> -> vector<32x256xf32>
    %cst_18 = arith.constant 0.000000e+00 : f32
    %25 = vector.broadcast %cst_18 : f32 to vector<32x256xf32>
    %26 = arith.maximumf %24, %25 : vector<32x256xf32>
    %c0_19 = arith.constant 0 : index
    %c0_20 = arith.constant 0 : index
    %c0_21 = arith.constant 0 : index
    %27 = vector.load %arg7[%c0_19, %c0_20, %c0_21] : memref<2x32x256xf32, #tpu.memory_space<vmem>>, vector<1x32x256xf32>
    %28 = vector.shape_cast %27 : vector<1x32x256xf32> to vector<32x256xf32>
    %29 = vector.shape_cast %26 : vector<32x256xf32> to vector<1x32x256xf32>
    tpu.vector_store %arg7[%c0_19, %c0_20, %c0_21], %29 {strides = array<i32>} : memref<2x32x256xf32, #tpu.memory_space<vmem>>, vector<1x32x256xf32>,
    %c1 = arith.constant 1 : index
    %c0_22 = arith.constant 0 : index
    %c0_23 = arith.constant 0 : index
    %30 = vector.load %arg1[%c1, %c0_22, %c0_23] : memref<2x128x256xf32, #tpu.memory_space<vmem>>, vector<1x128x256xf32>
    %31 = vector.shape_cast %30 : vector<1x128x256xf32> to vector<128x256xf32>
    %cst_24 = arith.constant dense<0.000000e+00> : vector<128xf32>
    %32 = vector.multi_reduction <add>, %31, %cst_24 [1] : vector<128x256xf32> to vector<128xf32>
    %33 = vector.shape_cast %32 : vector<128xf32> to vector<128x1xf32>
    %cst_25 = arith.constant 3.906250e-03 : f32
    %34 = vector.broadcast %cst_25 : f32 to vector<128x1xf32>
    %35 = arith.mulf %33, %34 : vector<128x1xf32>
    %cst_26 = arith.constant dense<0.000000e+00> : vector<16x1xf32>
    %36 = tpu.matmul %0, %35, %cst_26 {dimension_numbers = #tpu.dot_dimension_numbers<[1], [0], [0], [1], [0, 0, 1, 1], [], []>} : vector<16x128xf32>, vector<128x1xf32>, vector<16x1xf32> -> vector<16x1xf32>
    %37 = arith.addf %36, %1 : vector<16x1xf32>
    %cst_27 = arith.constant 0.000000e+00 : f32
    %38 = vector.broadcast %cst_27 : f32 to vector<16x1xf32>
    %39 = arith.maximumf %37, %38 : vector<16x1xf32>
    %cst_28 = arith.constant dense<0.000000e+00> : vector<1x128xf32>
    %40 = tpu.matmul %39, %2, %cst_28 {dimension_numbers = #tpu.dot_dimension_numbers<[0], [0], [1], [1], [0, 1, 1, 1], [], []>} : vector<16x1xf32>, vector<16x128xf32>, vector<1x128xf32> -> vector<1x128xf32>
    %41 = arith.addf %40, %3 : vector<1x128xf32>
    %42 = arith.negf %41 : vector<1x128xf32>
    %43 = math.exp %42 : vector<1x128xf32>
    %cst_29 = arith.constant 1.000000e+00 : f32
    %44 = vector.broadcast %cst_29 : f32 to vector<1x128xf32>
    %45 = arith.addf %44, %43 : vector<1x128xf32>
    %46 = arith.divf %44, %45 : vector<1x128xf32>
    %47 = vector.broadcast %46 : vector<1x128xf32> to vector<32x128xf32>
    %48 = arith.mulf %4, %47 : vector<32x128xf32>
    %cst_30 = arith.constant dense<0.000000e+00> : vector<32x256xf32>
    %49 = tpu.matmul %48, %31, %cst_30 {dimension_numbers = #tpu.dot_dimension_numbers<[1], [0], [0], [1], [0, 0, 1, 1], [], []>} : vector<32x128xf32>, vector<128x256xf32>, vector<32x256xf32> -> vector<32x256xf32>
    %cst_31 = arith.constant 0.000000e+00 : f32
    %50 = vector.broadcast %cst_31 : f32 to vector<32x256xf32>
    %51 = arith.maximumf %49, %50 : vector<32x256xf32>
    %c1_32 = arith.constant 1 : index
    %c0_33 = arith.constant 0 : index
    %c0_34 = arith.constant 0 : index
    %52 = vector.load %arg7[%c1_32, %c0_33, %c0_34] : memref<2x32x256xf32, #tpu.memory_space<vmem>>, vector<1x32x256xf32>
    %53 = vector.shape_cast %52 : vector<1x32x256xf32> to vector<32x256xf32>
    %54 = vector.shape_cast %51 : vector<32x256xf32> to vector<1x32x256xf32>
    tpu.vector_store %arg7[%c1_32, %c0_33, %c0_34], %54 {strides = array<i32>} : memref<2x32x256xf32, #tpu.memory_space<vmem>>, vector<1x32x256xf32>,
    return
  }
  func.func @transform_0(%arg0: i32) -> (i32, i32, i32) {
    %c0_i32 = arith.constant 0 : i32
    %c0_i32_0 = arith.constant 0 : i32
    %c0_i32_1 = arith.constant 0 : i32
    return %arg0, %c0_i32, %c0_i32_0 : i32, i32, i32
  }
  func.func @transform_1(%arg0: i32) -> (i32, i32) {
    %c0_i32 = arith.constant 0 : i32
    %c0_i32_0 = arith.constant 0 : i32
    %c0_i32_1 = arith.constant 0 : i32
    return %c0_i32, %c0_i32_0 : i32, i32
  }
  func.func @transform_2(%arg0: i32) -> (i32, i32) {
    %c0_i32 = arith.constant 0 : i32
    %c0_i32_0 = arith.constant 0 : i32
    %c0_i32_1 = arith.constant 0 : i32
    return %c0_i32, %c0_i32_0 : i32, i32
  }
  func.func @transform_3(%arg0: i32) -> (i32, i32) {
    %c0_i32 = arith.constant 0 : i32
    %c0_i32_0 = arith.constant 0 : i32
    %c0_i32_1 = arith.constant 0 : i32
    return %c0_i32, %c0_i32_0 : i32, i32
  }
  func.func @transform_4(%arg0: i32) -> (i32, i32) {
    %c0_i32 = arith.constant 0 : i32
    %c0_i32_0 = arith.constant 0 : i32
    %c0_i32_1 = arith.constant 0 : i32
    return %c0_i32, %c0_i32_0 : i32, i32
  }
  func.func @transform_5(%arg0: i32) -> (i32, i32) {
    %c0_i32 = arith.constant 0 : i32
    %c0_i32_0 = arith.constant 0 : i32
    %c0_i32_1 = arith.constant 0 : i32
    return %c0_i32, %c0_i32_0 : i32, i32
  }
  func.func @transform_6(%arg0: i32) -> (i32, i32, i32) {
    %c0_i32 = arith.constant 0 : i32
    %c0_i32_0 = arith.constant 0 : i32
    %c0_i32_1 = arith.constant 0 : i32
    return %arg0, %c0_i32, %c0_i32_0 : i32, i32, i32
  }
}

</mosaic_0001>

<llo_original>
// kernel: tpu_custom_call.1
$region0: #{tpu_custom_call.1}
  #allocation0 [shape = 'u32[]', space=smem, size = 0x4, offset = 0x4, fixed_abs, tag = 'smem constant byte address 0x4 - core index']
  #allocation1 [shape = 'u32[144,128]{1,0:T(1,128)}', space=vmem, size = 0x12000, scoped, tag = 'internal scratch']
  %s0 = inlined_call_operand.hbm [shape: f32[4,128,256], index: 0, kind: input, shape index: {}]
  %s1 = inlined_call_operand.hbm [shape: f32[16,128], index: 1, kind: input, shape index: {}]
  %s2 = inlined_call_operand.vmem [shape: f32[16,1], index: 2, kind: input, shape index: {}]
  %s3 = inlined_call_operand.hbm [shape: f32[16,128], index: 3, kind: input, shape index: {}]
  %s4 = inlined_call_operand.vmem [shape: f32[1,128], index: 4, kind: input, shape index: {}]
  %s5 = inlined_call_operand.vmem [shape: f32[32,128], index: 5, kind: input, shape index: {}]
  %s6 = inlined_call_operand.hbm [shape: f32[4,32,256], index: 6, kind: output, shape index: {}]
  %s7 = sld [smem:[#allocation0]]
  $region69: #{tpu_custom_call.1} parent=0
    _
  %s9 = ssub.s32 1, %s7
  %s10 = scalar_select 0, %s9, %s7
  $region1: #{tpu_custom_call.1} parent=0
    #allocation2 [shape = 'u8[524288]{0}', space=vmem, size = 0x80000, scoped, tag = 'input window, operand 0']
    #allocation3 [shape = 's32[2]{0}', space=sflag, size = 0x8, scoped, tag = 'scoped memory for tpu_custom_call.1']
    #allocation4 [shape = 's32[2]{0}', space=sflag, size = 0x8, scoped, tag = 'scoped memory for tpu_custom_call.1']
    #allocation5 [shape = 'u8[8192]{0}', space=vmem, size = 0x2000, scoped, tag = 'input window, operand 1, single buffered']
    #allocation6 [shape = 's32[1]{0}', space=sflag, size = 0x4, scoped, tag = 'scoped memory for tpu_custom_call.1']
    #allocation7 [shape = 'u8[8192]{0}', space=vmem, size = 0x2000, scoped, tag = 'input window, operand 3, single buffered']
    #allocation8 [shape = 'u8[131072]{0}', space=vmem, size = 0x20000, scoped, tag = 'output window, operand 0']
    %11 = vsyncpa [#allocation3], 0
    %s12 = scalar_lea.sflag [#allocation3], 1
    %13 = vsyncpa %s12, 0
    %14 = vsyncpa [#allocation6], 0
    %15 = vsyncpa [#allocation4], 0
    %s16 = scalar_lea.sflag [#allocation4], 1
    %17 = vsyncpa %s16, 0
    loop: start=0, step=1, limit=4
    $region2: #{tpu_custom_call.1} parent=1 // loop_pre_header
      _
    $region3: #{tpu_custom_call.1} parent=1 // loop_header
      %s19 = sphi 0, %s23
      %p20 = scmp.ge.s32.totalorder %s19, 4
      %s29 = sphi 0, %s31
      %s32 = sphi 0, %s29
      %s33 = sphi 0, %s32
      %s49 = sphi 0, %s33
      %s53 = sphi 0, %s53
      %s55 = sphi 0, %s53
      %s56 = sphi 0, %s55
      %s70 = sphi 0, %s56
      %s74 = sphi 0, %s74
      %s76 = sphi 0, %s74
      %s77 = sphi 0, %s76
      %s91 = sphi 0, %s77
      %s95 = sphi 0, %s95
      %s97 = sphi 0, %s95
      %s98 = sphi 0, %s97
      %s112 = sphi 0, %s98
      %s116 = sphi 0, %s116
      %s118 = sphi 0, %s116
      %s119 = sphi 0, %s118
      %s133 = sphi 0, %s119
      %s137 = sphi 0, %s137
      %s139 = sphi 0, %s137
      %s140 = sphi 0, %s139
      %s154 = sphi 0, %s140
      %s160 = sphi 0, %s162
      %s163 = sphi 0, %s160
      %s164 = sphi 0, %s163
      %s180 = sphi 0, %s164
    $region4: #{tpu_custom_call.1} parent=1 // loop_header_branch
      %22 = sbr.rel (%p20) target = $region8
    $region5: #{tpu_custom_call.1} parent=1 // loop_body
      %s24 = ssub.s32 %s19, 1
      %s25 = ssub.s32 %s19, 2
      %s26 = sadd.s32 %s19, 1
      %s27 = ssub.s32 %s19, %s26
      %p28 = scmp.eq.s32.totalorder %s27, 0
      %s30 = sadd.s32 %s29, 1
      %s31 = scalar_select %p28, %s29, %s30
      %p34 = pneg %p28
      %p35 = scmp.eq.s32.totalorder %s19, 1
      %p36 = por %p34, %p35
      %p37 = scmp.ne.s32.totalorder %s29, %s32
      %p38 = scmp.eq.s32.totalorder %s19, 0
      %p39 = por %p37, %p38
      %p40 = scmp.ne.s32.totalorder %s29, %s32
      %p41 = scmp.eq.s32.totalorder %s24, 1
      %p42 = por %p40, %p41
      %p43 = scmp.ne.s32.totalorder %s32, %s33
      %p44 = scmp.eq.s32.totalorder %s24, 0
      %p45 = por %p43, %p44
      %p46 = scmp.ne.s32.totalorder %s32, %s33
      %p47 = scmp.eq.s32.totalorder %s25, 1
      %p48 = por %p46, %p47
      %p50 = scmp.ne.s32.totalorder %s33, %s49
      %p51 = scmp.eq.s32.totalorder %s25, 0
      %p52 = por %p50, %p51
      %s54 = sadd.s32 %s53, 1
      %p57 = scmp.eq.s32.totalorder %s19, 1
      %p58 = scmp.ne.s32.totalorder %s53, %s55
      %p59 = scmp.eq.s32.totalorder %s19, 0
      %p60 = por %p58, %p59
      %p61 = scmp.ne.s32.totalorder %s53, %s55
      %p62 = scmp.eq.s32.totalorder %s24, 1
      %p63 = por %p61, %p62
      %p64 = scmp.ne.s32.totalorder %s55, %s56
      %p65 = scmp.eq.s32.totalorder %s24, 0
      %p66 = por %p64, %p65
      %p67 = scmp.ne.s32.totalorder %s55, %s56
      %p68 = scmp.eq.s32.totalorder %s25, 1
      %p69 = por %p67, %p68
      %p71 = scmp.ne.s32.totalorder %s56, %s70
      %p72 = scmp.eq.s32.totalorder %s25, 0
      %p73 = por %p71, %p72
      %s75 = sadd.s32 %s74, 1
      %p78 = scmp.eq.s32.totalorder %s19, 1
      %p79 = scmp.ne.s32.totalorder %s74, %s76
      %p80 = scmp.eq.s32.totalorder %s19, 0
      %p81 = por %p79, %p80
      %p82 = scmp.ne.s32.totalorder %s74, %s76
      %p83 = scmp.eq.s32.totalorder %s24, 1
      %p84 = por %p82, %p83
      %p85 = scmp.ne.s32.totalorder %s76, %s77
      %p86 = scmp.eq.s32.totalorder %s24, 0
      %p87 = por %p85, %p86
      %p88 = scmp.ne.s32.totalorder %s76, %s77
      %p89 = scmp.eq.s32.totalorder %s25, 1
      %p90 = por %p88, %p89
      %p92 = scmp.ne.s32.totalorder %s77, %s91
      %p93 = scmp.eq.s32.totalorder %s25, 0
      %p94 = por %p92, %p93
      %s96 = sadd.s32 %s95, 1
      %p99 = scmp.eq.s32.totalorder %s19, 1
      %p100 = scmp.ne.s32.totalorder %s95, %s97
      %p101 = scmp.eq.s32.totalorder %s19, 0
      %p102 = por %p100, %p101
      %p103 = scmp.ne.s32.totalorder %s95, %s97
      %p104 = scmp.eq.s32.totalorder %s24, 1
      %p105 = por %p103, %p104
      %p106 = scmp.ne.s32.totalorder %s97, %s98
      %p107 = scmp.eq.s32.totalorder %s24, 0
      %p108 = por %p106, %p107
      %p109 = scmp.ne.s32.totalorder %s97, %s98
      %p110 = scmp.eq.s32.totalorder %s25, 1
      %p111 = por %p109, %p110
      %p113 = scmp.ne.s32.totalorder %s98, %s112
      %p114 = scmp.eq.s32.totalorder %s25, 0
      %p115 = por %p113, %p114
      %s117 = sadd.s32 %s116, 1
      %p120 = scmp.eq.s32.totalorder %s19, 1
      %p121 = scmp.ne.s32.totalorder %s116, %s118
      %p122 = scmp.eq.s32.totalorder %s19, 0
      %p123 = por %p121, %p122
      %p124 = scmp.ne.s32.totalorder %s116, %s118
      %p125 = scmp.eq.s32.totalorder %s24, 1
      %p126 = por %p124, %p125
      %p127 = scmp.ne.s32.totalorder %s118, %s119
      %p128 = scmp.eq.s32.totalorder %s24, 0
      %p129 = por %p127, %p128
      %p130 = scmp.ne.s32.totalorder %s118, %s119
      %p131 = scmp.eq.s32.totalorder %s25, 1
      %p132 = por %p130, %p131
      %p134 = scmp.ne.s32.totalorder %s119, %s133
      %p135 = scmp.eq.s32.totalorder %s25, 0
      %p136 = por %p134, %p135
      %s138 = sadd.s32 %s137, 1
      %p141 = scmp.eq.s32.totalorder %s19, 1
      %p142 = scmp.ne.s32.totalorder %s137, %s139
      %p143 = scmp.eq.s32.totalorder %s19, 0
      %p144 = por %p142, %p143
      %p145 = scmp.ne.s32.totalorder %s137, %s139
      %p146 = scmp.eq.s32.totalorder %s24, 1
      %p147 = por %p145, %p146
      %p148 = scmp.ne.s32.totalorder %s139, %s140
      %p149 = scmp.eq.s32.totalorder %s24, 0
      %p150 = por %p148, %p149
      %p151 = scmp.ne.s32.totalorder %s139, %s140
      %p152 = scmp.eq.s32.totalorder %s25, 1
      %p153 = por %p151, %p152
      %p155 = scmp.ne.s32.totalorder %s140, %s154
      %p156 = scmp.eq.s32.totalorder %s25, 0
      %p157 = por %p155, %p156
      %s158 = ssub.s32 %s19, %s26
      %p159 = scmp.eq.s32.totalorder %s158, 0
      %s161 = sadd.s32 %s160, 1
      %s162 = scalar_select %p159, %s160, %s161
      %p165 = pneg %p159
      %p166 = scmp.eq.s32.totalorder %s19, 1
      %p167 = por %p165, %p166
      %p168 = scmp.ne.s32.totalorder %s160, %s163
      %p169 = scmp.eq.s32.totalorder %s19, 0
      %p170 = por %p168, %p169
      %p171 = scmp.ne.s32.totalorder %s160, %s163
      %p172 = scmp.eq.s32.totalorder %s24, 1
      %p173 = por %p171, %p172
      %p174 = scmp.ne.s32.totalorder %s163, %s164
      %p175 = scmp.eq.s32.totalorder %s24, 0
      %p176 = por %p174, %p175
      %p177 = scmp.ne.s32.totalorder %s163, %s164
      %p178 = scmp.eq.s32.totalorder %s25, 1
      %p179 = por %p177, %p178
      %p181 = scmp.ne.s32.totalorder %s164, %s180
      %p182 = scmp.eq.s32.totalorder %s25, 0
      %p183 = por %p181, %p182
      %p184 = scmp.le.s32.totalorder 1, %s19
      %p185 = scmp.lt.s32.totalorder %s19, 3
      %p186 = pnand %p184, %p185
      %p187 = pneg %p186
      // Predicated region
      $region9: #{tpu_custom_call.1} parent=5 // pred_check
        _
      $region10: #{tpu_custom_call.1} parent=5 // pred_check_branch
        %189 = sbr.rel (%p186) target = $region12
      $region11: #{tpu_custom_call.1} parent=5 // pred_region
        %s190 = ssub.s32 %s19, 1
        // Predicated region
        $region13: #{tpu_custom_call.1} parent=11 // pred_check
          %p191 = pneg %p66
        $region14: #{tpu_custom_call.1} parent=11 // pred_check_branch
          %193 = sbr.rel (%p191) target = $region16
        $region15: #{tpu_custom_call.1} parent=11 // pred_region
          %s195 = ssub.s32 256, 256
          %196 = vsyncadd [#allocation6], %s195
          %s197 = sshll.u32 [#allocation5], 4
          %s198 = int_to_ptr.vmem [resolvable:$true] %s197
          %203 = dma.hbm_to_vmem [thread:$0]  %s1, 256, %s198, [#allocation6], 128, 128, 8
        $region16: #{tpu_custom_call.1} parent=11 // pred_fallthru
          _
        // Predicated region
        $region17: #{tpu_custom_call.1} parent=11 // pred_check
          %p204 = pneg %p87
        $region18: #{tpu_custom_call.1} parent=11 // pred_check_branch
          %206 = sbr.rel (%p204) target = $region20
        $region19: #{tpu_custom_call.1} parent=11 // pred_region
          _
        $region20: #{tpu_custom_call.1} parent=11 // pred_fallthru
          _
        // Predicated region
        $region21: #{tpu_custom_call.1} parent=11 // pred_check
          %p207 = pneg %p108
        $region22: #{tpu_custom_call.1} parent=11 // pred_check_branch
          %209 = sbr.rel (%p207) target = $region24
        $region23: #{tpu_custom_call.1} parent=11 // pred_region
          %s211 = ssub.s32 256, 256
          %212 = vsyncadd [#allocation6], %s211
          %s213 = sshll.u32 [#allocation7], 4
          %s214 = int_to_ptr.vmem [resolvable:$true] %s213
          %219 = dma.hbm_to_vmem [thread:$0]  %s3, 256, %s214, [#allocation6], 128, 128, 8
        $region24: #{tpu_custom_call.1} parent=11 // pred_fallthru
          _
        // Predicated region
        $region25: #{tpu_custom_call.1} parent=11 // pred_check
          %p220 = pneg %p129
        $region26: #{tpu_custom_call.1} parent=11 // pred_check_branch
          %222 = sbr.rel (%p220) target = $region28
        $region27: #{tpu_custom_call.1} parent=11 // pred_region
          _
        $region28: #{tpu_custom_call.1} parent=11 // pred_fallthru
          _
        // Predicated region
        $region29: #{tpu_custom_call.1} parent=11 // pred_check
          %p223 = pneg %p150
        $region30: #{tpu_custom_call.1} parent=11 // pred_check_branch
          %225 = sbr.rel (%p223) target = $region32
        $region31: #{tpu_custom_call.1} parent=11 // pred_region
          _
        $region32: #{tpu_custom_call.1} parent=11 // pred_fallthru
          _
      $region12: #{tpu_custom_call.1} parent=5 // pred_fallthru
        _
      %p226 = scmp.lt.s32.totalorder %s19, 2
      // Predicated region
      $region33: #{tpu_custom_call.1} parent=5 // pred_check
        %p227 = pneg %p226
      $region34: #{tpu_custom_call.1} parent=5 // pred_check_branch
        %229 = sbr.rel (%p227) target = $region36
      $region35: #{tpu_custom_call.1} parent=5 // pred_region
        // Predicated region
        $region37: #{tpu_custom_call.1} parent=35 // pred_check
          %p230 = pneg %p39
        $region38: #{tpu_custom_call.1} parent=35 // pred_check_branch
          %232 = sbr.rel (%p230) target = $region40
        $region39: #{tpu_custom_call.1} parent=35 // pred_region
          %s233 = sand.u32 %s29, 1
          %s234 = scalar_lea.sflag [#allocation3], %s233
          %s235 = sand.u32 %s29, 1
          %s236 = smul.addr %s235, 512
          %s237 = scalar_lea.vmem [#allocation2], %s236
          %s238 = smul.u32 2, %s19
          %s240 = ssub.s32 8192, 8192
          %241 = vsyncadd %s234, %s240
          %s242 = smul.addr %s238, 32
          %s243 = smul.addr %s242, 128
          %s244 = scalar_lea.hbm %s0, %s243
          %s245 = sshll.u32 %s237, 4
          %s246 = int_to_ptr.vmem [resolvable:$true] %s245
          %251 = dma.hbm_to_vmem [thread:$0]  %s244, 8192, %s246, %s234, 256, 256, 16
        $region40: #{tpu_custom_call.1} parent=35 // pred_fallthru
          _
      $region36: #{tpu_custom_call.1} parent=5 // pred_fallthru
        _
      %p252 = scmp.le.s32.totalorder 1, %s19
      %p253 = scmp.lt.s32.totalorder %s19, 3
      %p254 = pnand %p252, %p253
      %p255 = pneg %p254
      // Predicated region
      $region41: #{tpu_custom_call.1} parent=5 // pred_check
        _
      $region42: #{tpu_custom_call.1} parent=5 // pred_check_branch
        %257 = sbr.rel (%p254) target = $region44
      $region43: #{tpu_custom_call.1} parent=5 // pred_region
        %s258 = ssub.s32 %s19, 1
        %s259 = sand.u32 %s32, 1
        %s260 = scalar_lea.sflag [#allocation3], %s259
        %s261 = sand.u32 %s32, 1
        %s262 = smul.addr %s261, 512
        %s263 = scalar_lea.vmem [#allocation2], %s262
        // Predicated region
        $region45: #{tpu_custom_call.1} parent=43 // pred_check
          %p264 = pneg %p45
        $region46: #{tpu_custom_call.1} parent=43 // pred_check_branch
          %266 = sbr.rel (%p264) target = $region48
        $region47: #{tpu_custom_call.1} parent=43 // pred_region
          %267 = dma.done %s260, 8192
        $region48: #{tpu_custom_call.1} parent=43 // pred_fallthru
          _
        // Predicated region
        $region49: #{tpu_custom_call.1} parent=43 // pred_check
          %p268 = pneg %p66
        $region50: #{tpu_custom_call.1} parent=43 // pred_check_branch
          %270 = sbr.rel (%p268) target = $region52
        $region51: #{tpu_custom_call.1} parent=43 // pred_region
          %271 = dma.done [#allocation6], 256
        $region52: #{tpu_custom_call.1} parent=43 // pred_fallthru
          _
        // Predicated region
        $region53: #{tpu_custom_call.1} parent=43 // pred_check
          %p272 = pneg %p108
        $region54: #{tpu_custom_call.1} parent=43 // pred_check_branch
          %274 = sbr.rel (%p272) target = $region56
        $region55: #{tpu_custom_call.1} parent=43 // pred_region
          %275 = dma.done [#allocation6], 256
        $region56: #{tpu_custom_call.1} parent=43 // pred_fallthru
          _
        %s276 = sand.u32 %s32, 1
        %s277 = scalar_lea.sflag [#allocation3], %s276
        %s278 = sand.u32 %s32, 1
        %s279 = smul.addr %s278, 512
        %s280 = scalar_lea.vmem [#allocation2], %s279
        %p281 = pneg %p45
        %p282 = pneg %p42
        %p283 = pneg %p66
        %p284 = pneg %p63
        %p285 = pneg %p87
        %p286 = pneg %p84
        %p287 = pneg %p108
        %p288 = pneg %p105
        %p289 = pneg %p129
        %p290 = pneg %p126
        %p291 = pneg %p150
        %p292 = pneg %p147
        %p293 = pneg %p176
        %p294 = pneg %p173
        %s295 = sand.u32 %s163, 1
        %s296 = scalar_lea.sflag [#allocation4], %s295
        %s297 = sand.u32 %s163, 1
        %s298 = smul.addr %s297, 128
        %s299 = scalar_lea.vmem [#allocation8], %s298
        %s300 = smul.u32 2, %s24
        %s301 = smul.u32 2, %s24
        %v302 = vld [vmem:[#allocation5] sm:$0xff]
        %v303 = vld [vmem:[#allocation5 + $0x8] sm:$0xff]
        %v304 = vld [vmem:[%s2] sm:$0xff]
        %v305 = vld [vmem:[%s2 + $0x8] sm:$0xff]
        %v306 = vld [vmem:[#allocation7] sm:$0xff]
        %v307 = vld [vmem:[#allocation7 + $0x8] sm:$0xff]
        %v308 = vld [vmem:[%s4] sm:$0x1]
        %v309 = vld [vmem:[%s5] sm:$0xff]
        %v310 = vld [vmem:[%s5 + $0x8] sm:$0xff]
        %v311 = vld [vmem:[%s5 + $0x10] sm:$0xff]
        %v312 = vld [vmem:[%s5 + $0x18] sm:$0xff]
        %v313 = vld [vmem:[%s263] sm:$0xff]
        %v314 = vld [vmem:[%s263 + $0x8] sm:$0xff]
        %v315 = vld [vmem:[%s263 + $0x10] sm:$0xff]
        %v316 = vld [vmem:[%s263 + $0x18] sm:$0xff]
        %v317 = vld [vmem:[%s263 + $0x20] sm:$0xff]
        %v318 = vld [vmem:[%s263 + $0x28] sm:$0xff]
        %v319 = vld [vmem:[%s263 + $0x30] sm:$0xff]
        %v320 = vld [vmem:[%s263 + $0x38] sm:$0xff]
        %v321 = vld [vmem:[%s263 + $0x40] sm:$0xff]
        %v322 = vld [vmem:[%s263 + $0x48] sm:$0xff]
        %v323 = vld [vmem:[%s263 + $0x50] sm:$0xff]
        %v324 = vld [vmem:[%s263 + $0x58] sm:$0xff]
        %v325 = vld [vmem:[%s263 + $0x60] sm:$0xff]
        %v326 = vld [vmem:[%s263 + $0x68] sm:$0xff]
        %v327 = vld [vmem:[%s263 + $0x70] sm:$0xff]
        %v328 = vld [vmem:[%s263 + $0x78] sm:$0xff]
        %v329 = vld [vmem:[%s263 + $0x80] sm:$0xff]
        %v330 = vld [vmem:[%s263 + $0x88] sm:$0xff]
        %v331 = vld [vmem:[%s263 + $0x90] sm:$0xff]
        %v332 = vld [vmem:[%s263 + $0x98] sm:$0xff]
        %v333 = vld [vmem:[%s263 + $0xa0] sm:$0xff]
        %v334 = vld [vmem:[%s263 + $0xa8] sm:$0xff]
        %v335 = vld [vmem:[%s263 + $0xb0] sm:$0xff]
        %v336 = vld [vmem:[%s263 + $0xb8] sm:$0xff]
        %v337 = vld [vmem:[%s263 + $0xc0] sm:$0xff]
        %v338 = vld [vmem:[%s263 + $0xc8] sm:$0xff]
        %v339 = vld [vmem:[%s263 + $0xd0] sm:$0xff]
        %v340 = vld [vmem:[%s263 + $0xd8] sm:$0xff]
        %v341 = vld [vmem:[%s263 + $0xe0] sm:$0xff]
        %v342 = vld [vmem:[%s263 + $0xe8] sm:$0xff]
        %v343 = vld [vmem:[%s263 + $0xf0] sm:$0xff]
        %v344 = vld [vmem:[%s263 + $0xf8] sm:$0xff]
        %v345 = vadd.f32 %v313, %v314
        %346 = vadd.xlane.f32.xlu0 %v345
        %v347 = vpop.xlane.xlu0 %346
        %v348 = vadd.f32 %v315, %v316
        %349 = vadd.xlane.f32.xlu0 %v348
        %v350 = vpop.xlane.xlu0 %349
        %v351 = vadd.f32 %v317, %v318
        %352 = vadd.xlane.f32.xlu0 %v351
        %v353 = vpop.xlane.xlu0 %352
        %v354 = vadd.f32 %v319, %v320
        %355 = vadd.xlane.f32.xlu0 %v354
        %v356 = vpop.xlane.xlu0 %355
        %v357 = vadd.f32 %v321, %v322
        %358 = vadd.xlane.f32.xlu0 %v357
        %v359 = vpop.xlane.xlu0 %358
        %v360 = vadd.f32 %v323, %v324
        %361 = vadd.xlane.f32.xlu0 %v360
        %v362 = vpop.xlane.xlu0 %361
        %v363 = vadd.f32 %v325, %v326
        %364 = vadd.xlane.f32.xlu0 %v363
        %v365 = vpop.xlane.xlu0 %364
        %v366 = vadd.f32 %v327, %v328
        %367 = vadd.xlane.f32.xlu0 %v366
        %v368 = vpop.xlane.xlu0 %367
        %v369 = vadd.f32 %v329, %v330
        %370 = vadd.xlane.f32.xlu0 %v369
        %v371 = vpop.xlane.xlu0 %370
        %v372 = vadd.f32 %v331, %v332
        %373 = vadd.xlane.f32.xlu0 %v372
        %v374 = vpop.xlane.xlu0 %373
        %v375 = vadd.f32 %v333, %v334
        %376 = vadd.xlane.f32.xlu0 %v375
        %v377 = vpop.xlane.xlu0 %376
        %v378 = vadd.f32 %v335, %v336
        %379 = vadd.xlane.f32.xlu0 %v378
        %v380 = vpop.xlane.xlu0 %379
        %v381 = vadd.f32 %v337, %v338
        %382 = vadd.xlane.f32.xlu0 %v381
        %v383 = vpop.xlane.xlu0 %382
        %v384 = vadd.f32 %v339, %v340
        %385 = vadd.xlane.f32.xlu0 %v384
        %v386 = vpop.xlane.xlu0 %385
        %v387 = vadd.f32 %v341, %v342
        %388 = vadd.xlane.f32.xlu0 %v387
        %v389 = vpop.xlane.xlu0 %388
        %v390 = vadd.f32 %v343, %v344
        %391 = vadd.xlane.f32.xlu0 %v390
        %v392 = vpop.xlane.xlu0 %391
        %v393 = vmul.f32 %v347, 0.00390625
        %v394 = vmul.f32 %v350, 0.00390625
        %v395 = vmul.f32 %v353, 0.00390625
        %v396 = vmul.f32 %v356, 0.00390625
        %v397 = vmul.f32 %v359, 0.00390625
        %v398 = vmul.f32 %v362, 0.00390625
        %v399 = vmul.f32 %v365, 0.00390625
        %v400 = vmul.f32 %v368, 0.00390625
        %v401 = vmul.f32 %v371, 0.00390625
        %v402 = vmul.f32 %v374, 0.00390625
        %v403 = vmul.f32 %v377, 0.00390625
        %v404 = vmul.f32 %v380, 0.00390625
        %v405 = vmul.f32 %v383, 0.00390625
        %v406 = vmul.f32 %v386, 0.00390625
        %v407 = vmul.f32 %v389, 0.00390625
        %v408 = vmul.f32 %v392, 0.00390625
        %409 = vmatprep.subr.mxu0 0.0
        %410 = vmatpush1.msra.mxu0 %v393
        %411 = vmatprep.subr.mxu0 0.0
        %412 = vmatpush1.msra.mxu0 %v394
        %413 = vmatprep.subr.mxu0 0.0
        %414 = vmatpush1.msra.mxu0 %v395
        %415 = vmatprep.subr.mxu0 0.0
        %416 = vmatpush1.msra.mxu0 %v396
        %417 = vmatprep.subr.mxu0 0.0
        %418 = vmatpush1.msra.mxu0 %v397
        %419 = vmatprep.subr.mxu0 0.0
        %420 = vmatpush1.msra.mxu0 %v398
        %421 = vmatprep.subr.mxu0 0.0
        %422 = vmatpush1.msra.mxu0 %v399
        %423 = vmatprep.subr.mxu0 0.0
        %424 = vmatpush1.msra.mxu0 %v400
        %425 = vmatprep.subr.mxu0 0.0
        %426 = vmatpush1.msra.mxu0 %v401
        %427 = vmatprep.subr.mxu0 0.0
        %428 = vmatpush1.msra.mxu0 %v402
        %429 = vmatprep.subr.mxu0 0.0
        %430 = vmatpush1.msra.mxu0 %v403
        %431 = vmatprep.subr.mxu0 0.0
        %432 = vmatpush1.msra.mxu0 %v404
        %433 = vmatprep.subr.mxu0 0.0
        %434 = vmatpush1.msra.mxu0 %v405
        %435 = vmatprep.subr.mxu0 0.0
        %436 = vmatpush1.msra.mxu0 %v406
        %437 = vmatprep.subr.mxu0 0.0
        %438 = vmatpush1.msra.mxu0 %v407
        %439 = vmatprep.subr.mxu0 0.0
        %440 = vmatpush1.msra.mxu0 %v408
        %441 = vmatprep.subr.mxu0 0.0
        %442 = vmatpush1.msra.mxu0 0.0
        %443 = vmatprep.subr.mxu0 0.0
        %444 = vmatpush1.msra.mxu0 0.0
        %445 = vmatprep.subr.mxu0 0.0
        %446 = vmatpush1.msra.mxu0 0.0
        %447 = vmatprep.subr.mxu0 0.0
        %448 = vmatpush1.msra.mxu0 0.0
        %449 = vmatprep.subr.mxu0 0.0
        %450 = vmatpush1.msra.mxu0 0.0
        %451 = vmatprep.subr.mxu0 0.0
        %452 = vmatpush1.msra.mxu0 0.0
        %453 = vmatprep.subr.mxu0 0.0
        %454 = vmatpush1.msra.mxu0 0.0
        %455 = vmatprep.subr.mxu0 0.0
        %456 = vmatpush1.msra.mxu0 0.0
        %457 = vmatprep.subr.mxu0 0.0
        %458 = vmatpush1.msra.mxu0 0.0
        %459 = vmatprep.subr.mxu0 0.0
        %460 = vmatpush1.msra.mxu0 0.0
        %461 = vmatprep.subr.mxu0 0.0
        %462 = vmatpush1.msra.mxu0 0.0
        %463 = vmatprep.subr.mxu0 0.0
        %464 = vmatpush1.msra.mxu0 0.0
        %465 = vmatprep.subr.mxu0 0.0
        %466 = vmatpush1.msra.mxu0 0.0
        %467 = vmatprep.subr.mxu0 0.0
        %468 = vmatpush1.msra.mxu0 0.0
        %469 = vmatprep.subr.mxu0 0.0
        %470 = vmatpush1.msra.mxu0 0.0
        %471 = vmatprep.subr.mxu0 0.0
        %472 = vmatpush1.msra.mxu0 0.0
        %473 = vmatprep.mubr.f32.mxu0 0.0
        %474 = vmatmul.mubr.f32.gmra.mrb[0].mxu0 %v302
        %v475 = vpop.f32.mrb[0].mxu0
        %v476 = vadd.f32 %v304, %v475
        %v477 = vpop.f32.mrb[0].mxu0
        %478 = vmatprep.mubr.f32.mxu0 0.0
        %479 = vmatmul.mubr.f32.gmra.mrb[0].mxu0 %v303
        %v480 = vpop.f32.mrb[0].mxu0
        %v481 = vadd.f32 %v305, %v480
        %v482 = vpop.f32.mrb[0].mxu0
        %483 = vdwg.mxu0
        %v484 = vmax.f32 %v476, 0.0
        %v485 = vmax.f32 %v481, 0.0
        %486 = vxpose.xlu0.b32.start [1/16] %v484, 128
        %487 = vxpose.xlu0.b32.cont [2/16] %v485, 128
        %488 = vxpose.xlu0.b32.cont [3/16] 0.0, 128
        %489 = vxpose.xlu0.b32.cont [4/16] 0.0, 128
        %490 = vxpose.xlu0.b32.cont [5/16] 0.0, 128
        %491 = vxpose.xlu0.b32.cont [6/16] 0.0, 128
        %492 = vxpose.xlu0.b32.cont [7/16] 0.0, 128
        %493 = vxpose.xlu0.b32.cont [8/16] 0.0, 128
        %494 = vxpose.xlu0.b32.cont [9/16] 0.0, 128
        %495 = vxpose.xlu0.b32.cont [10/16] 0.0, 128
        %496 = vxpose.xlu0.b32.cont [11/16] 0.0, 128
        %497 = vxpose.xlu0.b32.cont [12/16] 0.0, 128
        %498 = vxpose.xlu0.b32.cont [13/16] 0.0, 128
        %499 = vxpose.xlu0.b32.cont [14/16] 0.0, 128
        %500 = vxpose.xlu0.b32.cont [15/16] 0.0, 128
        %501 = vxpose.xlu0.b32.end [16/16] 0.0, 128
        %v502 = vpop.trf.xlu0
        %v503 = vpop.trf.xlu0
        %v504 = vpop.trf.xlu0
        %v505 = vpop.trf.xlu0
        %v506 = vpop.trf.xlu0
        %v507 = vpop.trf.xlu0
        %v508 = vpop.trf.xlu0
        %v509 = vpop.trf.xlu0
        %v510 = vpop.trf.xlu0
        %v511 = vpop.trf.xlu0
        %v512 = vpop.trf.xlu0
        %v513 = vpop.trf.xlu0
        %v514 = vpop.trf.xlu0
        %v515 = vpop.trf.xlu0
        %v516 = vpop.trf.xlu0
        %v517 = vpop.trf.xlu0
        %vm518 = vcmask 130048
        %v520 = vsel %vm518, %v502, 0
        %522 = vmatprep.subr.mxu0 0.0
        %523 = vmatpush1.msra.mxu0 %v306
        %524 = vmatprep.subr.mxu0 0.0
        %525 = vmatpush1.msra.mxu0 %v307
        %526 = vmatprep.subr.mxu0 0.0
        %527 = vmatpush1.msra.mxu0 0.0
        %528 = vmatprep.subr.mxu0 0.0
        %529 = vmatpush1.msra.mxu0 0.0
        %530 = vmatprep.subr.mxu0 0.0
        %531 = vmatpush1.msra.mxu0 0.0
        %532 = vmatprep.subr.mxu0 0.0
        %533 = vmatpush1.msra.mxu0 0.0
        %534 = vmatprep.subr.mxu0 0.0
        %535 = vmatpush1.msra.mxu0 0.0
        %536 = vmatprep.subr.mxu0 0.0
        %537 = vmatpush1.msra.mxu0 0.0
        %538 = vmatprep.subr.mxu0 0.0
        %539 = vmatpush1.msra.mxu0 0.0
        %540 = vmatprep.subr.mxu0 0.0
        %541 = vmatpush1.msra.mxu0 0.0
        %542 = vmatprep.subr.mxu0 0.0
        %543 = vmatpush1.msra.mxu0 0.0
        %544 = vmatprep.subr.mxu0 0.0
        %545 = vmatpush1.msra.mxu0 0.0
        %546 = vmatprep.subr.mxu0 0.0
        %547 = vmatpush1.msra.mxu0 0.0
        %548 = vmatprep.subr.mxu0 0.0
        %549 = vmatpush1.msra.mxu0 0.0
        %550 = vmatprep.subr.mxu0 0.0
        %551 = vmatpush1.msra.mxu0 0.0
        %552 = vmatprep.subr.mxu0 0.0
        %553 = vmatpush1.msra.mxu0 0.0
        %554 = vmatprep.subr.mxu0 0.0
        %555 = vmatpush1.msra.mxu0 0.0
        %556 = vmatprep.subr.mxu0 0.0
        %557 = vmatpush1.msra.mxu0 0.0
        %558 = vmatprep.subr.mxu0 0.0
        %559 = vmatpush1.msra.mxu0 0.0
        %560 = vmatprep.subr.mxu0 0.0
        %561 = vmatpush1.msra.mxu0 0.0
        %562 = vmatprep.subr.mxu0 0.0
        %563 = vmatpush1.msra.mxu0 0.0
        %564 = vmatprep.subr.mxu0 0.0
        %565 = vmatpush1.msra.mxu0 0.0
        %566 = vmatprep.subr.mxu0 0.0
        %567 = vmatpush1.msra.mxu0 0.0
        %568 = vmatprep.subr.mxu0 0.0
        %569 = vmatpush1.msra.mxu0 0.0
        %570 = vmatprep.subr.mxu0 0.0
        %571 = vmatpush1.msra.mxu0 0.0
        %572 = vmatprep.subr.mxu0 0.0
        %573 = vmatpush1.msra.mxu0 0.0
        %574 = vmatprep.subr.mxu0 0.0
        %575 = vmatpush1.msra.mxu0 0.0
        %576 = vmatprep.subr.mxu0 0.0
        %577 = vmatpush1.msra.mxu0 0.0
        %578 = vmatprep.subr.mxu0 0.0
        %579 = vmatpush1.msra.mxu0 0.0
        %580 = vmatprep.subr.mxu0 0.0
        %581 = vmatpush1.msra.mxu0 0.0
        %582 = vmatprep.subr.mxu0 0.0
        %583 = vmatpush1.msra.mxu0 0.0
        %584 = vmatprep.subr.mxu0 0.0
        %585 = vmatpush1.msra.mxu0 0.0
        %586 = vmatprep.mubr.f32.mxu0 0.0
        %587 = vmatmul.mubr.f32.gmra.mrb[0].mxu0 %v520
        %v588 = vpop.f32.mrb[0].mxu0
        %v589 = vadd.f32 %v308, %v588
        %v590 = vpop.f32.mrb[0].mxu0
        %591 = vdwg.mxu0
        %v592 = vxor.u32 %v589, 2147483648
        %v593 = vmul.f32 %v592, 1.442695
        %v594 = vpow.pop %v593
        %v595 = vadd.f32 %v594, 1.0
        %v596 = vrcp.pop %v595
        %v597 = vmul.f32 1.0, %v596
        %v598 = vlaneseq
        %v599 = vshrl.u32 %v598, 7
        %v600 = vsub.s32 0, %v599
        %v601 = vrot.slane %v597, %v600
        %v602 = vmul.f32 %v309, %v601
        %v603 = vmul.f32 %v310, %v601
        %v604 = vmul.f32 %v311, %v601
        %v605 = vmul.f32 %v312, %v601
        %606 = vmatprep.subr.mxu0 %v314
        %607 = vmatpush1.msra.mxu0 %v313
        %608 = vmatprep.subr.mxu0 %v316
        %609 = vmatpush1.msra.mxu0 %v315
        %610 = vmatprep.subr.mxu0 %v318
        %611 = vmatpush1.msra.mxu0 %v317
        %612 = vmatprep.subr.mxu0 %v320
        %613 = vmatpush1.msra.mxu0 %v319
        %614 = vmatprep.subr.mxu0 %v322
        %615 = vmatpush1.msra.mxu0 %v321
        %616 = vmatprep.subr.mxu0 %v324
        %617 = vmatpush1.msra.mxu0 %v323
        %618 = vmatprep.subr.mxu0 %v326
        %619 = vmatpush1.msra.mxu0 %v325
        %620 = vmatprep.subr.mxu0 %v328
        %621 = vmatpush1.msra.mxu0 %v327
        %622 = vmatprep.subr.mxu0 %v330
        %623 = vmatpush1.msra.mxu0 %v329
        %624 = vmatprep.subr.mxu0 %v332
        %625 = vmatpush1.msra.mxu0 %v331
        %626 = vmatprep.subr.mxu0 %v334
        %627 = vmatpush1.msra.mxu0 %v333
        %628 = vmatprep.subr.mxu0 %v336
        %629 = vmatpush1.msra.mxu0 %v335
        %630 = vmatprep.subr.mxu0 %v338
        %631 = vmatpush1.msra.mxu0 %v337
        %632 = vmatprep.subr.mxu0 %v340
        %633 = vmatpush1.msra.mxu0 %v339
        %634 = vmatprep.subr.mxu0 %v342
        %635 = vmatpush1.msra.mxu0 %v341
        %636 = vmatprep.subr.mxu0 %v344
        %637 = vmatpush1.msra.mxu0 %v343
        %638 = vmatprep.subr.mxu0 0.0
        %639 = vmatpush1.msra.mxu0 0.0
        %640 = vmatprep.subr.mxu0 0.0
        %641 = vmatpush1.msra.mxu0 0.0
        %642 = vmatprep.subr.mxu0 0.0
        %643 = vmatpush1.msra.mxu0 0.0
        %644 = vmatprep.subr.mxu0 0.0
        %645 = vmatpush1.msra.mxu0 0.0
        %646 = vmatprep.subr.mxu0 0.0
        %647 = vmatpush1.msra.mxu0 0.0
        %648 = vmatprep.subr.mxu0 0.0
        %649 = vmatpush1.msra.mxu0 0.0
        %650 = vmatprep.subr.mxu0 0.0
        %651 = vmatpush1.msra.mxu0 0.0
        %652 = vmatprep.subr.mxu0 0.0
        %653 = vmatpush1.msra.mxu0 0.0
        %654 = vmatprep.subr.mxu0 0.0
        %655 = vmatpush1.msra.mxu0 0.0
        %656 = vmatprep.subr.mxu0 0.0
        %657 = vmatpush1.msra.mxu0 0.0
        %658 = vmatprep.subr.mxu0 0.0
        %659 = vmatpush1.msra.mxu0 0.0
        %660 = vmatprep.subr.mxu0 0.0
        %661 = vmatpush1.msra.mxu0 0.0
        %662 = vmatprep.subr.mxu0 0.0
        %663 = vmatpush1.msra.mxu0 0.0
        %664 = vmatprep.subr.mxu0 0.0
        %665 = vmatpush1.msra.mxu0 0.0
        %666 = vmatprep.subr.mxu0 0.0
        %667 = vmatpush1.msra.mxu0 0.0
        %668 = vmatprep.subr.mxu0 0.0
        %669 = vmatpush1.msra.mxu0 0.0
        %670 = vmatprep.mubr.f32.mxu0 0.0
        %671 = vmatmul.mubr.f32.gmra.mrb[0].mxu0 %v602
        %v672 = vpop.f32.mrb[0].mxu0
        %v673 = vadd.f32 0.0, %v672
        %v674 = vpop.f32.mrb[0].mxu0
        %v675 = vadd.f32 0.0, %v674
        %676 = vmatprep.mubr.f32.mxu0 0.0
        %677 = vmatmul.mubr.f32.gmra.mrb[0].mxu0 %v603
        %v678 = vpop.f32.mrb[0].mxu0
        %v679 = vadd.f32 0.0, %v678
        %v680 = vpop.f32.mrb[0].mxu0
        %v681 = vadd.f32 0.0, %v680
        %682 = vmatprep.mubr.f32.mxu0 0.0
        %683 = vmatmul.mubr.f32.gmra.mrb[0].mxu0 %v604
        %v684 = vpop.f32.mrb[0].mxu0
        %v685 = vadd.f32 0.0, %v684
        %v686 = vpop.f32.mrb[0].mxu0
        %v687 = vadd.f32 0.0, %v686
        %688 = vmatprep.mubr.f32.mxu0 0.0
        %689 = vmatmul.mubr.f32.gmra.mrb[0].mxu0 %v605
        %v690 = vpop.f32.mrb[0].mxu0
        %v691 = vadd.f32 0.0, %v690
        %v692 = vpop.f32.mrb[0].mxu0
        %v693 = vadd.f32 0.0, %v692
        %694 = vdwg.mxu0
        %v695 = vmax.f32 %v673, 0.0
        %v696 = vmax.f32 %v675, 0.0
        %v697 = vmax.f32 %v679, 0.0
        %v698 = vmax.f32 %v681, 0.0
        %v699 = vmax.f32 %v685, 0.0
        %v700 = vmax.f32 %v687, 0.0
        %v701 = vmax.f32 %v691, 0.0
        %v702 = vmax.f32 %v693, 0.0
        %703 = vst [vmem:[%s299] sm:$0xff] %v695
        %704 = vst [vmem:[%s299 + $0x8] sm:$0xff] %v696
        %705 = vst [vmem:[%s299 + $0x10] sm:$0xff] %v697
        %706 = vst [vmem:[%s299 + $0x18] sm:$0xff] %v698
        %707 = vst [vmem:[%s299 + $0x20] sm:$0xff] %v699
        %708 = vst [vmem:[%s299 + $0x28] sm:$0xff] %v700
        %709 = vst [vmem:[%s299 + $0x30] sm:$0xff] %v701
        %710 = vst [vmem:[%s299 + $0x38] sm:$0xff] %v702
        %s711 = scalar_lea.vmem %s263, 256 [#allocation2]
        %v712 = vld [vmem:[%s711] sm:$0xff]
        %v713 = vld [vmem:[%s711 + $0x8] sm:$0xff]
        %v714 = vld [vmem:[%s711 + $0x10] sm:$0xff]
        %v715 = vld [vmem:[%s711 + $0x18] sm:$0xff]
        %v716 = vld [vmem:[%s711 + $0x20] sm:$0xff]
        %v717 = vld [vmem:[%s711 + $0x28] sm:$0xff]
        %v718 = vld [vmem:[%s711 + $0x30] sm:$0xff]
        %v719 = vld [vmem:[%s711 + $0x38] sm:$0xff]
        %v720 = vld [vmem:[%s711 + $0x40] sm:$0xff]
        %v721 = vld [vmem:[%s711 + $0x48] sm:$0xff]
        %v722 = vld [vmem:[%s711 + $0x50] sm:$0xff]
        %v723 = vld [vmem:[%s711 + $0x58] sm:$0xff]
        %v724 = vld [vmem:[%s711 + $0x60] sm:$0xff]
        %v725 = vld [vmem:[%s711 + $0x68] sm:$0xff]
        %v726 = vld [vmem:[%s711 + $0x70] sm:$0xff]
        %v727 = vld [vmem:[%s711 + $0x78] sm:$0xff]
        %v728 = vld [vmem:[%s711 + $0x80] sm:$0xff]
        %v729 = vld [vmem:[%s711 + $0x88] sm:$0xff]
        %v730 = vld [vmem:[%s711 + $0x90] sm:$0xff]
        %v731 = vld [vmem:[%s711 + $0x98] sm:$0xff]
        %v732 = vld [vmem:[%s711 + $0xa0] sm:$0xff]
        %v733 = vld [vmem:[%s711 + $0xa8] sm:$0xff]
        %v734 = vld [vmem:[%s711 + $0xb0] sm:$0xff]
        %v735 = vld [vmem:[%s711 + $0xb8] sm:$0xff]
        %v736 = vld [vmem:[%s711 + $0xc0] sm:$0xff]
        %v737 = vld [vmem:[%s711 + $0xc8] sm:$0xff]
        %v738 = vld [vmem:[%s711 + $0xd0] sm:$0xff]
        %v739 = vld [vmem:[%s711 + $0xd8] sm:$0xff]
        %v740 = vld [vmem:[%s711 + $0xe0] sm:$0xff]
        %v741 = vld [vmem:[%s711 + $0xe8] sm:$0xff]
        %v742 = vld [vmem:[%s711 + $0xf0] sm:$0xff]
        %v743 = vld [vmem:[%s711 + $0xf8] sm:$0xff]
        %v744 = vadd.f32 %v712, %v713
        %745 = vadd.xlane.f32.xlu0 %v744
        %v746 = vpop.xlane.xlu0 %745
        %v747 = vadd.f32 %v714, %v715
        %748 = vadd.xlane.f32.xlu0 %v747
        %v749 = vpop.xlane.xlu0 %748
        %v750 = vadd.f32 %v716, %v717
        %751 = vadd.xlane.f32.xlu0 %v750
        %v752 = vpop.xlane.xlu0 %751
        %v753 = vadd.f32 %v718, %v719
        %754 = vadd.xlane.f32.xlu0 %v753
        %v755 = vpop.xlane.xlu0 %754
        %v756 = vadd.f32 %v720, %v721
        %757 = vadd.xlane.f32.xlu0 %v756
        %v758 = vpop.xlane.xlu0 %757
        %v759 = vadd.f32 %v722, %v723
        %760 = vadd.xlane.f32.xlu0 %v759
        %v761 = vpop.xlane.xlu0 %760
        %v762 = vadd.f32 %v724, %v725
        %763 = vadd.xlane.f32.xlu0 %v762
        %v764 = vpop.xlane.xlu0 %763
        %v765 = vadd.f32 %v726, %v727
        %766 = vadd.xlane.f32.xlu0 %v765
        %v767 = vpop.xlane.xlu0 %766
        %v768 = vadd.f32 %v728, %v729
        %769 = vadd.xlane.f32.xlu0 %v768
        %v770 = vpop.xlane.xlu0 %769
        %v771 = vadd.f32 %v730, %v731
        %772 = vadd.xlane.f32.xlu0 %v771
        %v773 = vpop.xlane.xlu0 %772
        %v774 = vadd.f32 %v732, %v733
        %775 = vadd.xlane.f32.xlu0 %v774
        %v776 = vpop.xlane.xlu0 %775
        %v777 = vadd.f32 %v734, %v735
        %778 = vadd.xlane.f32.xlu0 %v777
        %v779 = vpop.xlane.xlu0 %778
        %v780 = vadd.f32 %v736, %v737
        %781 = vadd.xlane.f32.xlu0 %v780
        %v782 = vpop.xlane.xlu0 %781
        %v783 = vadd.f32 %v738, %v739
        %784 = vadd.xlane.f32.xlu0 %v783
        %v785 = vpop.xlane.xlu0 %784
        %v786 = vadd.f32 %v740, %v741
        %787 = vadd.xlane.f32.xlu0 %v786
        %v788 = vpop.xlane.xlu0 %787
        %v789 = vadd.f32 %v742, %v743
        %790 = vadd.xlane.f32.xlu0 %v789
        %v791 = vpop.xlane.xlu0 %790
        %v792 = vmul.f32 %v746, 0.00390625
        %v793 = vmul.f32 %v749, 0.00390625
        %v794 = vmul.f32 %v752, 0.00390625
        %v795 = vmul.f32 %v755, 0.00390625
        %v796 = vmul.f32 %v758, 0.00390625
        %v797 = vmul.f32 %v761, 0.00390625
        %v798 = vmul.f32 %v764, 0.00390625
        %v799 = vmul.f32 %v767, 0.00390625
        %v800 = vmul.f32 %v770, 0.00390625
        %v801 = vmul.f32 %v773, 0.00390625
        %v802 = vmul.f32 %v776, 0.00390625
        %v803 = vmul.f32 %v779, 0.00390625
        %v804 = vmul.f32 %v782, 0.00390625
        %v805 = vmul.f32 %v785, 0.00390625
        %v806 = vmul.f32 %v788, 0.00390625
        %v807 = vmul.f32 %v791, 0.00390625
        %808 = vmatprep.subr.mxu0 0.0
        %809 = vmatpush1.msra.mxu0 %v792
        %810 = vmatprep.subr.mxu0 0.0
        %811 = vmatpush1.msra.mxu0 %v793
        %812 = vmatprep.subr.mxu0 0.0
        %813 = vmatpush1.msra.mxu0 %v794
        %814 = vmatprep.subr.mxu0 0.0
        %815 = vmatpush1.msra.mxu0 %v795
        %816 = vmatprep.subr.mxu0 0.0
        %817 = vmatpush1.msra.mxu0 %v796
        %818 = vmatprep.subr.mxu0 0.0
        %819 = vmatpush1.msra.mxu0 %v797
        %820 = vmatprep.subr.mxu0 0.0
        %821 = vmatpush1.msra.mxu0 %v798
        %822 = vmatprep.subr.mxu0 0.0
        %823 = vmatpush1.msra.mxu0 %v799
        %824 = vmatprep.subr.mxu0 0.0
        %825 = vmatpush1.msra.mxu0 %v800
        %826 = vmatprep.subr.mxu0 0.0
        %827 = vmatpush1.msra.mxu0 %v801
        %828 = vmatprep.subr.mxu0 0.0
        %829 = vmatpush1.msra.mxu0 %v802
        %830 = vmatprep.subr.mxu0 0.0
        %831 = vmatpush1.msra.mxu0 %v803
        %832 = vmatprep.subr.mxu0 0.0
        %833 = vmatpush1.msra.mxu0 %v804
        %834 = vmatprep.subr.mxu0 0.0
        %835 = vmatpush1.msra.mxu0 %v805
        %836 = vmatprep.subr.mxu0 0.0
        %837 = vmatpush1.msra.mxu0 %v806
        %838 = vmatprep.subr.mxu0 0.0
        %839 = vmatpush1.msra.mxu0 %v807
        %840 = vmatprep.subr.mxu0 0.0
        %841 = vmatpush1.msra.mxu0 0.0
        %842 = vmatprep.subr.mxu0 0.0
        %843 = vmatpush1.msra.mxu0 0.0
        %844 = vmatprep.subr.mxu0 0.0
        %845 = vmatpush1.msra.mxu0 0.0
        %846 = vmatprep.subr.mxu0 0.0
        %847 = vmatpush1.msra.mxu0 0.0
        %848 = vmatprep.subr.mxu0 0.0
        %849 = vmatpush1.msra.mxu0 0.0
        %850 = vmatprep.subr.mxu0 0.0
        %851 = vmatpush1.msra.mxu0 0.0
        %852 = vmatprep.subr.mxu0 0.0
        %853 = vmatpush1.msra.mxu0 0.0
        %854 = vmatprep.subr.mxu0 0.0
        %855 = vmatpush1.msra.mxu0 0.0
        %856 = vmatprep.subr.mxu0 0.0
        %857 = vmatpush1.msra.mxu0 0.0
        %858 = vmatprep.subr.mxu0 0.0
        %859 = vmatpush1.msra.mxu0 0.0
        %860 = vmatprep.subr.mxu0 0.0
        %861 = vmatpush1.msra.mxu0 0.0
        %862 = vmatprep.subr.mxu0 0.0
        %863 = vmatpush1.msra.mxu0 0.0
        %864 = vmatprep.subr.mxu0 0.0
        %865 = vmatpush1.msra.mxu0 0.0
        %866 = vmatprep.subr.mxu0 0.0
        %867 = vmatpush1.msra.mxu0 0.0
        %868 = vmatprep.subr.mxu0 0.0
        %869 = vmatpush1.msra.mxu0 0.0
        %870 = vmatprep.subr.mxu0 0.0
        %871 = vmatpush1.msra.mxu0 0.0
        %872 = vmatprep.mubr.f32.mxu0 0.0
        %873 = vmatmul.mubr.f32.gmra.mrb[0].mxu0 %v302
        %v874 = vpop.f32.mrb[0].mxu0
        %v875 = vadd.f32 %v304, %v874
        %v876 = vpop.f32.mrb[0].mxu0
        %877 = vmatprep.mubr.f32.mxu0 0.0
        %878 = vmatmul.mubr.f32.gmra.mrb[0].mxu0 %v303
        %v879 = vpop.f32.mrb[0].mxu0
        %v880 = vadd.f32 %v305, %v879
        %v881 = vpop.f32.mrb[0].mxu0
        %882 = vdwg.mxu0
        %v883 = vmax.f32 %v875, 0.0
        %v884 = vmax.f32 %v880, 0.0
        %885 = vxpose.xlu0.b32.start [1/16] %v883, 128
        %886 = vxpose.xlu0.b32.cont [2/16] %v884, 128
        %887 = vxpose.xlu0.b32.cont [3/16] 0.0, 128
        %888 = vxpose.xlu0.b32.cont [4/16] 0.0, 128
        %889 = vxpose.xlu0.b32.cont [5/16] 0.0, 128
        %890 = vxpose.xlu0.b32.cont [6/16] 0.0, 128
        %891 = vxpose.xlu0.b32.cont [7/16] 0.0, 128
        %892 = vxpose.xlu0.b32.cont [8/16] 0.0, 128
        %893 = vxpose.xlu0.b32.cont [9/16] 0.0, 128
        %894 = vxpose.xlu0.b32.cont [10/16] 0.0, 128
        %895 = vxpose.xlu0.b32.cont [11/16] 0.0, 128
        %896 = vxpose.xlu0.b32.cont [12/16] 0.0, 128
        %897 = vxpose.xlu0.b32.cont [13/16] 0.0, 128
        %898 = vxpose.xlu0.b32.cont [14/16] 0.0, 128
        %899 = vxpose.xlu0.b32.cont [15/16] 0.0, 128
        %900 = vxpose.xlu0.b32.end [16/16] 0.0, 128
        %v901 = vpop.trf.xlu0
        %v902 = vpop.trf.xlu0
        %v903 = vpop.trf.xlu0
        %v904 = vpop.trf.xlu0
        %v905 = vpop.trf.xlu0
        %v906 = vpop.trf.xlu0
        %v907 = vpop.trf.xlu0
        %v908 = vpop.trf.xlu0
        %v909 = vpop.trf.xlu0
        %v910 = vpop.trf.xlu0
        %v911 = vpop.trf.xlu0
        %v912 = vpop.trf.xlu0
        %v913 = vpop.trf.xlu0
        %v914 = vpop.trf.xlu0
        %v915 = vpop.trf.xlu0
        %v916 = vpop.trf.xlu0
        %v918 = vsel %vm518, %v901, 0
        %920 = vmatprep.subr.mxu0 0.0
        %921 = vmatpush1.msra.mxu0 %v306
        %922 = vmatprep.subr.mxu0 0.0
        %923 = vmatpush1.msra.mxu0 %v307
        %924 = vmatprep.subr.mxu0 0.0
        %925 = vmatpush1.msra.mxu0 0.0
        %926 = vmatprep.subr.mxu0 0.0
        %927 = vmatpush1.msra.mxu0 0.0
        %928 = vmatprep.subr.mxu0 0.0
        %929 = vmatpush1.msra.mxu0 0.0
        %930 = vmatprep.subr.mxu0 0.0
        %931 = vmatpush1.msra.mxu0 0.0
        %932 = vmatprep.subr.mxu0 0.0
        %933 = vmatpush1.msra.mxu0 0.0
        %934 = vmatprep.subr.mxu0 0.0
        %935 = vmatpush1.msra.mxu0 0.0
        %936 = vmatprep.subr.mxu0 0.0
        %937 = vmatpush1.msra.mxu0 0.0
        %938 = vmatprep.subr.mxu0 0.0
        %939 = vmatpush1.msra.mxu0 0.0
        %940 = vmatprep.subr.mxu0 0.0
        %941 = vmatpush1.msra.mxu0 0.0
        %942 = vmatprep.subr.mxu0 0.0
        %943 = vmatpush1.msra.mxu0 0.0
        %944 = vmatprep.subr.mxu0 0.0
        %945 = vmatpush1.msra.mxu0 0.0
        %946 = vmatprep.subr.mxu0 0.0
        %947 = vmatpush1.msra.mxu0 0.0
        %948 = vmatprep.subr.mxu0 0.0
        %949 = vmatpush1.msra.mxu0 0.0
        %950 = vmatprep.subr.mxu0 0.0
        %951 = vmatpush1.msra.mxu0 0.0
        %952 = vmatprep.subr.mxu0 0.0
        %953 = vmatpush1.msra.mxu0 0.0
        %954 = vmatprep.subr.mxu0 0.0
        %955 = vmatpush1.msra.mxu0 0.0
        %956 = vmatprep.subr.mxu0 0.0
        %957 = vmatpush1.msra.mxu0 0.0
        %958 = vmatprep.subr.mxu0 0.0
        %959 = vmatpush1.msra.mxu0 0.0
        %960 = vmatprep.subr.mxu0 0.0
        %961 = vmatpush1.msra.mxu0 0.0
        %962 = vmatprep.subr.mxu0 0.0
        %963 = vmatpush1.msra.mxu0 0.0
        %964 = vmatprep.subr.mxu0 0.0
        %965 = vmatpush1.msra.mxu0 0.0
        %966 = vmatprep.subr.mxu0 0.0
        %967 = vmatpush1.msra.mxu0 0.0
        %968 = vmatprep.subr.mxu0 0.0
        %969 = vmatpush1.msra.mxu0 0.0
        %970 = vmatprep.subr.mxu0 0.0
        %971 = vmatpush1.msra.mxu0 0.0
        %972 = vmatprep.subr.mxu0 0.0
        %973 = vmatpush1.msra.mxu0 0.0
        %974 = vmatprep.subr.mxu0 0.0
        %975 = vmatpush1.msra.mxu0 0.0
        %976 = vmatprep.subr.mxu0 0.0
        %977 = vmatpush1.msra.mxu0 0.0
        %978 = vmatprep.subr.mxu0 0.0
        %979 = vmatpush1.msra.mxu0 0.0
        %980 = vmatprep.subr.mxu0 0.0
        %981 = vmatpush1.msra.mxu0 0.0
        %982 = vmatprep.subr.mxu0 0.0
        %983 = vmatpush1.msra.mxu0 0.0
        %984 = vmatprep.mubr.f32.mxu0 0.0
        %985 = vmatmul.mubr.f32.gmra.mrb[0].mxu0 %v918
        %v986 = vpop.f32.mrb[0].mxu0
        %v987 = vadd.f32 %v308, %v986
        %v988 = vpop.f32.mrb[0].mxu0
        %989 = vdwg.mxu0
        %v990 = vxor.u32 %v987, 2147483648
        %v991 = vmul.f32 %v990, 1.442695
        %v992 = vpow.pop %v991
        %v993 = vadd.f32 %v992, 1.0
        %v994 = vrcp.pop %v993
        %v995 = vmul.f32 1.0, %v994
        %v996 = vlaneseq
        %v997 = vshrl.u32 %v996, 7
        %v998 = vsub.s32 0, %v997
        %v999 = vrot.slane %v995, %v998
        %v1000 = vmul.f32 %v309, %v999
        %v1001 = vmul.f32 %v310, %v999
        %v1002 = vmul.f32 %v311, %v999
        %v1003 = vmul.f32 %v312, %v999
        %1004 = vmatprep.subr.mxu0 %v713
        %1005 = vmatpush1.msra.mxu0 %v712
        %1006 = vmatprep.subr.mxu0 %v715
        %1007 = vmatpush1.msra.mxu0 %v714
        %1008 = vmatprep.subr.mxu0 %v717
        %1009 = vmatpush1.msra.mxu0 %v716
        %1010 = vmatprep.subr.mxu0 %v719
        %1011 = vmatpush1.msra.mxu0 %v718
        %1012 = vmatprep.subr.mxu0 %v721
        %1013 = vmatpush1.msra.mxu0 %v720
        %1014 = vmatprep.subr.mxu0 %v723
        %1015 = vmatpush1.msra.mxu0 %v722
        %1016 = vmatprep.subr.mxu0 %v725
        %1017 = vmatpush1.msra.mxu0 %v724
        %1018 = vmatprep.subr.mxu0 %v727
        %1019 = vmatpush1.msra.mxu0 %v726
        %1020 = vmatprep.subr.mxu0 %v729
        %1021 = vmatpush1.msra.mxu0 %v728
        %1022 = vmatprep.subr.mxu0 %v731
        %1023 = vmatpush1.msra.mxu0 %v730
        %1024 = vmatprep.subr.mxu0 %v733
        %1025 = vmatpush1.msra.mxu0 %v732
        %1026 = vmatprep.subr.mxu0 %v735
        %1027 = vmatpush1.msra.mxu0 %v734
        %1028 = vmatprep.subr.mxu0 %v737
        %1029 = vmatpush1.msra.mxu0 %v736
        %1030 = vmatprep.subr.mxu0 %v739
        %1031 = vmatpush1.msra.mxu0 %v738
        %1032 = vmatprep.subr.mxu0 %v741
        %1033 = vmatpush1.msra.mxu0 %v740
        %1034 = vmatprep.subr.mxu0 %v743
        %1035 = vmatpush1.msra.mxu0 %v742
        %1036 = vmatprep.subr.mxu0 0.0
        %1037 = vmatpush1.msra.mxu0 0.0
        %1038 = vmatprep.subr.mxu0 0.0
        %1039 = vmatpush1.msra.mxu0 0.0
        %1040 = vmatprep.subr.mxu0 0.0
        %1041 = vmatpush1.msra.mxu0 0.0
        %1042 = vmatprep.subr.mxu0 0.0
        %1043 = vmatpush1.msra.mxu0 0.0
        %1044 = vmatprep.subr.mxu0 0.0
        %1045 = vmatpush1.msra.mxu0 0.0
        %1046 = vmatprep.subr.mxu0 0.0
        %1047 = vmatpush1.msra.mxu0 0.0
        %1048 = vmatprep.subr.mxu0 0.0
        %1049 = vmatpush1.msra.mxu0 0.0
        %1050 = vmatprep.subr.mxu0 0.0
        %1051 = vmatpush1.msra.mxu0 0.0
        %1052 = vmatprep.subr.mxu0 0.0
        %1053 = vmatpush1.msra.mxu0 0.0
        %1054 = vmatprep.subr.mxu0 0.0
        %1055 = vmatpush1.msra.mxu0 0.0
        %1056 = vmatprep.subr.mxu0 0.0
        %1057 = vmatpush1.msra.mxu0 0.0
        %1058 = vmatprep.subr.mxu0 0.0
        %1059 = vmatpush1.msra.mxu0 0.0
        %1060 = vmatprep.subr.mxu0 0.0
        %1061 = vmatpush1.msra.mxu0 0.0
        %1062 = vmatprep.subr.mxu0 0.0
        %1063 = vmatpush1.msra.mxu0 0.0
        %1064 = vmatprep.subr.mxu0 0.0
        %1065 = vmatpush1.msra.mxu0 0.0
        %1066 = vmatprep.subr.mxu0 0.0
        %1067 = vmatpush1.msra.mxu0 0.0
        %1068 = vmatprep.mubr.f32.mxu0 0.0
        %1069 = vmatmul.mubr.f32.gmra.mrb[0].mxu0 %v1000
        %v1070 = vpop.f32.mrb[0].mxu0
        %v1071 = vadd.f32 0.0, %v1070
        %v1072 = vpop.f32.mrb[0].mxu0
        %v1073 = vadd.f32 0.0, %v1072
        %1074 = vmatprep.mubr.f32.mxu0 0.0
        %1075 = vmatmul.mubr.f32.gmra.mrb[0].mxu0 %v1001
        %v1076 = vpop.f32.mrb[0].mxu0
        %v1077 = vadd.f32 0.0, %v1076
        %v1078 = vpop.f32.mrb[0].mxu0
        %v1079 = vadd.f32 0.0, %v1078
        %1080 = vmatprep.mubr.f32.mxu0 0.0
        %1081 = vmatmul.mubr.f32.gmra.mrb[0].mxu0 %v1002
        %v1082 = vpop.f32.mrb[0].mxu0
        %v1083 = vadd.f32 0.0, %v1082
        %v1084 = vpop.f32.mrb[0].mxu0
        %v1085 = vadd.f32 0.0, %v1084
        %1086 = vmatprep.mubr.f32.mxu0 0.0
        %1087 = vmatmul.mubr.f32.gmra.mrb[0].mxu0 %v1003
        %v1088 = vpop.f32.mrb[0].mxu0
        %v1089 = vadd.f32 0.0, %v1088
        %v1090 = vpop.f32.mrb[0].mxu0
        %v1091 = vadd.f32 0.0, %v1090
        %1092 = vdwg.mxu0
        %v1093 = vmax.f32 %v1071, 0.0
        %v1094 = vmax.f32 %v1073, 0.0
        %v1095 = vmax.f32 %v1077, 0.0
        %v1096 = vmax.f32 %v1079, 0.0
        %v1097 = vmax.f32 %v1083, 0.0
        %v1098 = vmax.f32 %v1085, 0.0
        %v1099 = vmax.f32 %v1089, 0.0
        %v1100 = vmax.f32 %v1091, 0.0
        %s1101 = scalar_lea.vmem %s299, 64 [#allocation8]
        %1102 = vst [vmem:[%s1101] sm:$0xff] %v1093
        %1103 = vst [vmem:[%s1101 + $0x8] sm:$0xff] %v1094
        %1104 = vst [vmem:[%s1101 + $0x10] sm:$0xff] %v1095
        %1105 = vst [vmem:[%s1101 + $0x18] sm:$0xff] %v1096
        %1106 = vst [vmem:[%s1101 + $0x20] sm:$0xff] %v1097
        %1107 = vst [vmem:[%s1101 + $0x28] sm:$0xff] %v1098
        %1108 = vst [vmem:[%s1101 + $0x30] sm:$0xff] %v1099
        %1109 = vst [vmem:[%s1101 + $0x38] sm:$0xff] %v1100
        %s1110 = sand.u32 %s163, 1
        %s1111 = scalar_lea.sflag [#allocation4], %s1110
        %s1112 = sand.u32 %s163, 1
        %s1113 = smul.addr %s1112, 128
        %s1114 = scalar_lea.vmem [#allocation8], %s1113
        // Predicated region
        $region57: #{tpu_custom_call.1} parent=43 // pred_check
          %p1115 = pneg %p173
        $region58: #{tpu_custom_call.1} parent=43 // pred_check_branch
          %1117 = sbr.rel (%p1115) target = $region60
        $region59: #{tpu_custom_call.1} parent=43 // pred_region
          %s1118 = smul.u32 2, %s24
          %s1120 = ssub.s32 2048, 2048
          %1121 = vsyncadd %s1111, %s1120
          %s1122 = smul.addr %s1118, 8
          %s1123 = smul.addr %s1122, 128
          %s1124 = scalar_lea.hbm %s6, %s1123
          %s1125 = sshll.u32 %s1114, 4
          %s1126 = int_to_ptr.vmem [resolvable:$true] %s1125
          %1131 = dma.vmem_to_hbm [thread:$0]  %s1126, 2048, %s1124, %s1111, 256, 256, 16
        $region60: #{tpu_custom_call.1} parent=43 // pred_fallthru
          _
      $region44: #{tpu_custom_call.1} parent=5 // pred_fallthru
        _
      %p1132 = scmp.le.s32.totalorder 2, %s19
      // Predicated region
      $region61: #{tpu_custom_call.1} parent=5 // pred_check
        %p1133 = pneg %p1132
      $region62: #{tpu_custom_call.1} parent=5 // pred_check_branch
        %1135 = sbr.rel (%p1133) target = $region64
      $region63: #{tpu_custom_call.1} parent=5 // pred_region
        %s1136 = ssub.s32 %s19, 2
        // Predicated region
        $region65: #{tpu_custom_call.1} parent=63 // pred_check
          %p1137 = pneg %p179
        $region66: #{tpu_custom_call.1} parent=63 // pred_check_branch
          %1139 = sbr.rel (%p1137) target = $region68
        $region67: #{tpu_custom_call.1} parent=63 // pred_region
          %s1140 = sand.u32 %s164, 1
          %s1141 = scalar_lea.sflag [#allocation4], %s1140
          %s1142 = sand.u32 %s164, 1
          %s1143 = smul.addr %s1142, 128
          %s1144 = scalar_lea.vmem [#allocation8], %s1143
          %1145 = dma.done %s1141, 2048
        $region68: #{tpu_custom_call.1} parent=63 // pred_fallthru
          _
      $region64: #{tpu_custom_call.1} parent=5 // pred_fallthru
        _
    $region6: #{tpu_custom_call.1} parent=1 // loop_footer
      %s23 = sadd.s32 1, %s19
    $region7: #{tpu_custom_call.1} parent=1 // loop_footer_branch
      %18 = sbr.rel target = $region3
    $region8: #{tpu_custom_call.1} parent=1 // loop_exit
      _
    %1146 = vsyncpa [#allocation3], 1
    %s1147 = scalar_lea.sflag [#allocation3], 1
    %1148 = vsyncpa %s1147, 1
    %1149 = vsyncpa [#allocation6], 1
    %1150 = vsyncpa [#allocation4], 1
    %s1151 = scalar_lea.sflag [#allocation4], 1
    %1152 = vsyncpa %s1151, 1

</llo_original>
